<compile_context>
chip_gen: v7x
topology: tpu7x:2x2x1
jax: 0.10.0
libtpu: 0.0.40
codegen_flags: <defaults>
</compile_context>

<pallas_src>
import jax
import jax.numpy as jnp
from jax.experimental import pallas as pl
from jax.experimental.pallas import tpu as pltpu


# ---------------------------------------------------------------------------
# helpers
# ---------------------------------------------------------------------------
def _round_up(x, m):
    return ((x + m - 1) // m) * m


def _pick_tile_b(batch, tile_b, sublane):
    """Batch tile: as large as the batch allows (cap 512), sublane-aligned.

    Never split a small batch into multiple grid steps: v5e/v6e have a single
    TensorCore, so extra steps only add ~0.35 us/step overhead and underfill
    the MXU M dimension.
    """
    if tile_b is None:
        tile_b = min(512, _round_up(batch, sublane))
    else:
        tile_b = max(sublane, _round_up(tile_b, sublane))
        tile_b = min(tile_b, _round_up(batch, sublane))
    return tile_b


# ---------------------------------------------------------------------------
# kernel
# ---------------------------------------------------------------------------
def _make_critic_kernel(n_mid, n_heads, h0p):
    """Fused multi-head MLP critic kernel.

    Ref order:
      state, action,
      w1s [Ds, n_heads*h0p], w1a [Da, n_heads*h0p], b1 [1, n_heads*h0p],
      per mid layer, per head: (w [in, out], b [1, out]),
      w_last [n_heads, H_last], b_last [1, n_heads],
      out [tb, n_heads]
    """

    def kernel(*refs):
        s_ref, a_ref = refs[0], refs[1]
        w1s_ref, w1a_ref, b1_ref = refs[2], refs[3], refs[4]
        mid_refs = refs[5:5 + 2 * n_heads * n_mid]
        wl_ref = refs[5 + 2 * n_heads * n_mid]
        bl_ref = refs[6 + 2 * n_heads * n_mid]
        out_ref = refs[7 + 2 * n_heads * n_mid]

        cdt = w1s_ref.dtype  # MXU compute dtype (bf16 or f32); in-kernel cast

        # Fused layer 1 for all heads, split-K over (state | action) so no
        # concatenated/padded x copy is ever materialized in HBM.
        h = (jnp.dot(s_ref[...].astype(cdt), w1s_ref[...],
                     preferred_element_type=jnp.float32)
             + jnp.dot(a_ref[...].astype(cdt), w1a_ref[...],
                       preferred_element_type=jnp.float32)
             + b1_ref[...])
        h = jnp.maximum(h, 0.0)

        # Per-head split on a 128-aligned lane boundary (free static view).
        hs = [h[:, hd * h0p:(hd + 1) * h0p] for hd in range(n_heads)]

        # Middle hidden layers (per head), f32 accumulation.
        for li in range(n_mid):
            base = 2 * n_heads * li
            for hd in range(n_heads):
                w_ref = mid_refs[base + 2 * hd]
                b_ref = mid_refs[base + 2 * hd + 1]
                hs[hd] = jnp.maximum(
                    jnp.dot(hs[hd].astype(cdt), w_ref[...],
                            preferred_element_type=jnp.float32) + b_ref[...],
                    0.0)

        # Final out_features=1 layers: VPU multiply + lane reduction
        # (avoids an N=1 MXU matmul and its result-FIFO drain).
        wl = wl_ref[...].astype(jnp.float32)             # [n_heads, H_last]
        qs = [jnp.sum(hs[hd].astype(jnp.float32) * wl[hd:hd + 1, :],
                      axis=-1, keepdims=True) for hd in range(n_heads)]
        q = qs[0] if n_heads == 1 else jnp.concatenate(qs, axis=-1)
        out_ref[...] = (q + bl_ref[...]).astype(out_ref.dtype)

    return kernel


# ---------------------------------------------------------------------------
# parameter packing (torch layout -> kernel layout)
# ---------------------------------------------------------------------------
def _pack_heads(heads, state_dim, compute_dtype):
    """Pack a list of heads (each a list of (weight [out,in], bias [out]))."""
    n_layers = len(heads[0])
    assert n_layers >= 2, "need at least one hidden layer"
    h0 = heads[0][0][0].shape[0]
    h0p = _round_up(h0, 128)   # 128-align per-head lane split of fused layer 1

    w1s_list, w1a_list, b1_list = [], [], []
    for layers in heads:
        w, b = layers[0]                              # [H0, D], [H0]
        ws = jnp.pad(w[:, :state_dim].T, ((0, 0), (0, h0p - h0)))
        wa = jnp.pad(w[:, state_dim:].T, ((0, 0), (0, h0p - h0)))
        w1s_list.append(ws)
        w1a_list.append(wa)
        b1_list.append(jnp.pad(b, (0, h0p - h0)))

    packed = [
        jnp.concatenate(w1s_list, axis=1).astype(compute_dtype),   # [Ds, nH*h0p]
        jnp.concatenate(w1a_list, axis=1).astype(compute_dtype),   # [Da, nH*h0p]
        jnp.concatenate(b1_list)[None, :].astype(jnp.float32),     # [1,  nH*h0p]
    ]

    # Middle layers: [in, out] weights (first one K-padded to h0p), [1,out] bias.
    for li in range(1, n_layers - 1):
        for layers in heads:
            w, b = layers[li]
            wt = w.T
            if li == 1 and h0p != h0:
                wt = jnp.pad(wt, ((0, h0p - h0), (0, 0)))
            packed += [wt.astype(compute_dtype),
                       b[None, :].astype(jnp.float32)]

    # Final layer: stacked [n_heads, H_last] weights, [1, n_heads] biases.
    wl_list, bl_list = [], []
    for layers in heads:
        w, b = layers[-1]                             # [1, H_last], [1]
        if n_layers == 2 and h0p != h0:
            w = jnp.pad(w, ((0, 0), (0, h0p - h0)))
        wl_list.append(w)
        bl_list.append(b)
    packed += [jnp.concatenate(wl_list, axis=0).astype(jnp.float32),
               jnp.concatenate(bl_list)[None, :].astype(jnp.float32)]
    return tuple(packed)


def pack_params(raw_params, state_dim, *, compute_dtype=jnp.bfloat16):
    """Pack torch-layout params for both the twin (q1,q2) and Q1-only kernels.

    bf16 weights by default (MXU-native everywhere, halves weight DMA; biggest
    win on v5e); biases / accumulation stay f32.
    """
    q1_layers, q2_layers = raw_params
    return {
        "twin": _pack_heads([q1_layers, q2_layers], state_dim, compute_dtype),
        "q1": _pack_heads([q1_layers], state_dim, compute_dtype),
    }


# ---------------------------------------------------------------------------
# host-side wrappers
# ---------------------------------------------------------------------------
def _critic_call(state, action, packed, *, n_heads, tile_b=None):
    n_mid = (len(packed) - 5) // (2 * n_heads)
    h0p = packed[0].shape[1] // n_heads

    batch, s_dim = state.shape
    a_dim = action.shape[1]

    itemsize = jnp.dtype(state.dtype).itemsize
    sublane = max(8, 32 // itemsize)
    tb = _pick_tile_b(batch, tile_b, sublane)
    grid = (pl.cdiv(batch, tb),)

    def whole(arr):  # grid-invariant (resident) weight/bias block
        return pl.BlockSpec(arr.shape, lambda i: (0,) * arr.ndim)

    in_specs = [pl.BlockSpec((tb, s_dim), lambda i: (i, 0)),
                pl.BlockSpec((tb, a_dim), lambda i: (i, 0))]
    in_specs += [whole(p) for p in packed]

    # TODO(synk): on v7x verify that "parallel" shards the batch grid axis
    # across both TensorCores; if not, switch to pltpu.CORE_PARALLEL or a
    # pl.core_map split for the large-batch (>1 grid step) case.
    out = pl.pallas_call(
        _make_critic_kernel(n_mid, n_heads, h0p),
        out_shape=jax.ShapeDtypeStruct((batch, n_heads), jnp.float32),
        grid_spec=pltpu.PrefetchScalarGridSpec(
            num_scalar_prefetch=0,
            grid=grid,
            in_specs=in_specs,
            out_specs=pl.BlockSpec((tb, n_heads), lambda i: (i, 0)),
        ),
        compiler_params=pltpu.CompilerParams(
            dimension_semantics=("parallel",),
            vmem_limit_bytes=32 * 1024 * 1024),
    )(state, action, *packed)
    return out


def classic_critic_forward(state, action, packed_params, *, tile_b=None):
    """Pallas equivalent of ClassicCritic.forward(state, action) -> (q1, q2)."""
    out = _critic_call(state, action, packed_params["twin"],
                       n_heads=2, tile_b=tile_b)
    return out[:, 0:1], out[:, 1:2]


def classic_critic_q1_forward(state, action, packed_params, *, tile_b=None):
    """Pallas equivalent of ClassicCritic.q1_forward (Q1 head only)."""
    return _critic_call(state, action, packed_params["q1"],
                        n_heads=1, tile_b=tile_b)


# ---------------------------------------------------------------------------
# init + pure-JAX reference (torch layout, mirrors the PyTorch module)
# ---------------------------------------------------------------------------
def init_params(key, state_dim, action_dim, hidden_dims):
    """Torch-layout params: per layer (weight [out,in], bias [out]).
    Hidden layers: U(-1/sqrt(fan_in), +...); final layer: U(-0.003, 0.003)."""
    dims = [state_dim + action_dim] + list(hidden_dims) + [1]

    def make_head(key):
        layers = []
        for li in range(len(dims) - 1):
            fan_in, fan_out = dims[li], dims[li + 1]
            key, kw, kb = jax.random.split(key, 3)
            bound = 0.003 if li == len(dims) - 2 else 1.0 / float(fan_in) ** 0.5
            w = jax.random.uniform(kw, (fan_out, fan_in), jnp.float32,
                                   minval=-bound, maxval=bound)
            b = jax.random.uniform(kb, (fan_out,), jnp.float32,
                                   minval=-bound, maxval=bound)
            layers.append((w, b))
        return key, layers

    key, head1 = make_head(key)
    key, head2 = make_head(key)
    return (head1, head2)


def _reference_forward(state, action, raw_params):
    q1_layers, q2_layers = raw_params
    x = jnp.concatenate([state, action], axis=1)

    def head(x, layers):
        h = x
        for (w, b) in layers[:-1]:
            h = jnp.maximum(h @ w.T + b, 0.0)
        w, b = layers[-1]
        return h @ w.T + b

    return head(x, q1_layers), head(x, q2_layers)


# ---------------------------------------------------------------------------
if __name__ == "__main__":
    # Small, forward-consistent shapes: batch=32, state_dim=12, action_dim=4,
    # hidden_dims=[32, 32] (module default is [256, 256]; same structure).
    batch, state_dim, action_dim = 32, 12, 4
    hidden_dims = [32, 32]

    key = jax.random.PRNGKey(0)
    kp, ks, ka = jax.random.split(key, 3)

    raw = init_params(kp, state_dim, action_dim, hidden_dims)
    state = jax.random.normal(ks, (batch, state_dim), jnp.float32)
    action = jax.random.normal(ka, (batch, action_dim), jnp.float32)

    q1_ref, q2_ref = _reference_forward(state, action, raw)

    # f32-weight path (tight tolerance)
    packed_f32 = pack_params(raw, state_dim, compute_dtype=jnp.float32)
    q1, q2 = classic_critic_forward(state, action, packed_f32)
    jax.block_until_ready((q1, q2))
    assert q1.shape == (batch, 1) and q2.shape == (batch, 1)
    assert jnp.allclose(q1, q1_ref, atol=1e-5, rtol=1e-5)
    assert jnp.allclose(q2, q2_ref, atol=1e-5, rtol=1e-5)

    q1_only = classic_critic_q1_forward(state, action, packed_f32)
    jax.block_until_ready(q1_only)
    assert q1_only.shape == (batch, 1)
    assert jnp.allclose(q1_only, q1_ref, atol=1e-5, rtol=1e-5)

    # bf16-weight path (default; MXU-native; relaxed tolerance)
    packed_bf16 = pack_params(raw, state_dim)
    q1b, q2b = classic_critic_forward(state, action, packed_bf16)
    q1b_only = classic_critic_q1_forward(state, action, packed_bf16)
    jax.block_until_ready((q1b, q2b, q1b_only))
    assert jnp.allclose(q1b, q1_ref, atol=2e-3, rtol=2e-2)
    assert jnp.allclose(q2b, q2_ref, atol=2e-3, rtol=2e-2)
    assert jnp.allclose(q1b_only, q1_ref, atol=2e-3, rtol=2e-2)

    print("KERNEL_OK")
</pallas_src>

<mosaic_0001>
module attributes {stable_mosaic.version = 11 : i64} {
  func.func @kernel(%arg0: i32, %arg1: memref<32x12xf32, #tpu.memory_space<vmem>>, %arg2: memref<32x4xf32, #tpu.memory_space<vmem>>, %arg3: memref<12x256xf32, #tpu.memory_space<vmem>>, %arg4: memref<4x256xf32, #tpu.memory_space<vmem>>, %arg5: memref<1x256xf32, #tpu.memory_space<vmem>>, %arg6: memref<128x32xf32, #tpu.memory_space<vmem>>, %arg7: memref<1x32xf32, #tpu.memory_space<vmem>>, %arg8: memref<128x32xf32, #tpu.memory_space<vmem>>, %arg9: memref<1x32xf32, #tpu.memory_space<vmem>>, %arg10: memref<2x32xf32, #tpu.memory_space<vmem>>, %arg11: memref<1x2xf32, #tpu.memory_space<vmem>>, %arg12: memref<32x2xf32, #tpu.memory_space<vmem>>) attributes {dimension_semantics = [#tpu.dimension_semantics<parallel>], iteration_bounds = array<i64: 1>, scalar_prefetch = 0 : i64, scratch_operands = 0 : i64, tpu.core_type = #tpu.core_type<tc>, window_params = [{transform_indices = @transform_0, window_bounds = array<i64: 32, 12>}, {transform_indices = @transform_1, window_bounds = array<i64: 32, 4>}, {pipeline_mode = #tpu.pipeline_mode<synchronous>, transform_indices = @transform_2, window_bounds = array<i64: 12, 256>}, {pipeline_mode = #tpu.pipeline_mode<synchronous>, transform_indices = @transform_3, window_bounds = array<i64: 4, 256>}, {pipeline_mode = #tpu.pipeline_mode<synchronous>, transform_indices = @transform_4, window_bounds = array<i64: 1, 256>}, {pipeline_mode = #tpu.pipeline_mode<synchronous>, transform_indices = @transform_5, window_bounds = array<i64: 128, 32>}, {pipeline_mode = #tpu.pipeline_mode<synchronous>, transform_indices = @transform_6, window_bounds = array<i64: 1, 32>}, {pipeline_mode = #tpu.pipeline_mode<synchronous>, transform_indices = @transform_7, window_bounds = array<i64: 128, 32>}, {pipeline_mode = #tpu.pipeline_mode<synchronous>, transform_indices = @transform_8, window_bounds = array<i64: 1, 32>}, {pipeline_mode = #tpu.pipeline_mode<synchronous>, transform_indices = @transform_9, window_bounds = array<i64: 2, 32>}, {pipeline_mode = #tpu.pipeline_mode<synchronous>, transform_indices = @transform_10, window_bounds = array<i64: 1, 2>}, {transform_indices = @transform_11, window_bounds = array<i64: 32, 2>}]} {
    %c0 = arith.constant 0 : index
    %c0_0 = arith.constant 0 : index
    %0 = vector.load %arg1[%c0, %c0_0] : memref<32x12xf32, #tpu.memory_space<vmem>>, vector<32x12xf32>
    %c0_1 = arith.constant 0 : index
    %c0_2 = arith.constant 0 : index
    %1 = vector.load %arg3[%c0_1, %c0_2] : memref<12x256xf32, #tpu.memory_space<vmem>>, vector<12x256xf32>
    %cst = arith.constant dense<0.000000e+00> : vector<32x256xf32>
    %2 = tpu.matmul %0, %1, %cst {dimension_numbers = #tpu.dot_dimension_numbers<[1], [0], [0], [1], [0, 0, 1, 1], [], []>} : vector<32x12xf32>, vector<12x256xf32>, vector<32x256xf32> -> vector<32x256xf32>
    %c0_3 = arith.constant 0 : index
    %c0_4 = arith.constant 0 : index
    %3 = vector.load %arg2[%c0_3, %c0_4] : memref<32x4xf32, #tpu.memory_space<vmem>>, vector<32x4xf32>
    %c0_5 = arith.constant 0 : index
    %c0_6 = arith.constant 0 : index
    %4 = vector.load %arg4[%c0_5, %c0_6] : memref<4x256xf32, #tpu.memory_space<vmem>>, vector<4x256xf32>
    %cst_7 = arith.constant dense<0.000000e+00> : vector<32x256xf32>
    %5 = tpu.matmul %3, %4, %cst_7 {dimension_numbers = #tpu.dot_dimension_numbers<[1], [0], [0], [1], [0, 0, 1, 1], [], []>} : vector<32x4xf32>, vector<4x256xf32>, vector<32x256xf32> -> vector<32x256xf32>
    %6 = arith.addf %2, %5 : vector<32x256xf32>
    %c0_8 = arith.constant 0 : index
    %c0_9 = arith.constant 0 : index
    %7 = vector.load %arg5[%c0_8, %c0_9] : memref<1x256xf32, #tpu.memory_space<vmem>>, vector<1x256xf32>
    %8 = vector.broadcast %7 : vector<1x256xf32> to vector<32x256xf32>
    %9 = arith.addf %6, %8 : vector<32x256xf32>
    %cst_10 = arith.constant 0.000000e+00 : f32
    %10 = vector.broadcast %cst_10 : f32 to vector<32x256xf32>
    %11 = arith.maximumf %9, %10 : vector<32x256xf32>
    %12 = vector.extract_strided_slice %11 {offsets = [0, 0], sizes = [32, 128], strides = [1, 1]} : vector<32x256xf32> to vector<32x128xf32>
    %13 = vector.extract_strided_slice %11 {offsets = [0, 128], sizes = [32, 128], strides = [1, 1]} : vector<32x256xf32> to vector<32x128xf32>
    %c0_11 = arith.constant 0 : index
    %c0_12 = arith.constant 0 : index
    %14 = vector.load %arg6[%c0_11, %c0_12] : memref<128x32xf32, #tpu.memory_space<vmem>>, vector<128x32xf32>
    %cst_13 = arith.constant dense<0.000000e+00> : vector<32x32xf32>
    %15 = tpu.matmul %12, %14, %cst_13 {dimension_numbers = #tpu.dot_dimension_numbers<[1], [0], [0], [1], [0, 0, 1, 1], [], []>} : vector<32x128xf32>, vector<128x32xf32>, vector<32x32xf32> -> vector<32x32xf32>
    %c0_14 = arith.constant 0 : index
    %c0_15 = arith.constant 0 : index
    %16 = vector.load %arg7[%c0_14, %c0_15] : memref<1x32xf32, #tpu.memory_space<vmem>>, vector<1x32xf32>
    %17 = vector.broadcast %16 : vector<1x32xf32> to vector<32x32xf32>
    %18 = arith.addf %15, %17 : vector<32x32xf32>
    %cst_16 = arith.constant 0.000000e+00 : f32
    %19 = vector.broadcast %cst_16 : f32 to vector<32x32xf32>
    %20 = arith.maximumf %18, %19 : vector<32x32xf32>
    %c0_17 = arith.constant 0 : index
    %c0_18 = arith.constant 0 : index
    %21 = vector.load %arg8[%c0_17, %c0_18] : memref<128x32xf32, #tpu.memory_space<vmem>>, vector<128x32xf32>
    %cst_19 = arith.constant dense<0.000000e+00> : vector<32x32xf32>
    %22 = tpu.matmul %13, %21, %cst_19 {dimension_numbers = #tpu.dot_dimension_numbers<[1], [0], [0], [1], [0, 0, 1, 1], [], []>} : vector<32x128xf32>, vector<128x32xf32>, vector<32x32xf32> -> vector<32x32xf32>
    %c0_20 = arith.constant 0 : index
    %c0_21 = arith.constant 0 : index
    %23 = vector.load %arg9[%c0_20, %c0_21] : memref<1x32xf32, #tpu.memory_space<vmem>>, vector<1x32xf32>
    %24 = vector.broadcast %23 : vector<1x32xf32> to vector<32x32xf32>
    %25 = arith.addf %22, %24 : vector<32x32xf32>
    %cst_22 = arith.constant 0.000000e+00 : f32
    %26 = vector.broadcast %cst_22 : f32 to vector<32x32xf32>
    %27 = arith.maximumf %25, %26 : vector<32x32xf32>
    %c0_23 = arith.constant 0 : index
    %c0_24 = arith.constant 0 : index
    %28 = vector.load %arg10[%c0_23, %c0_24] : memref<2x32xf32, #tpu.memory_space<vmem>>, vector<2x32xf32>
    %29 = vector.extract_strided_slice %28 {offsets = [0, 0], sizes = [1, 32], strides = [1, 1]} : vector<2x32xf32> to vector<1x32xf32>
    %30 = vector.broadcast %29 : vector<1x32xf32> to vector<32x32xf32>
    %31 = arith.mulf %20, %30 : vector<32x32xf32>
    %cst_25 = arith.constant dense<0.000000e+00> : vector<32xf32>
    %32 = vector.multi_reduction <add>, %31, %cst_25 [1] : vector<32x32xf32> to vector<32xf32>
    %33 = vector.shape_cast %32 : vector<32xf32> to vector<32x1xf32>
    %34 = vector.extract_strided_slice %28 {offsets = [1, 0], sizes = [1, 32], strides = [1, 1]} : vector<2x32xf32> to vector<1x32xf32>
    %35 = vector.broadcast %34 : vector<1x32xf32> to vector<32x32xf32>
    %36 = arith.mulf %27, %35 : vector<32x32xf32>
    %cst_26 = arith.constant dense<0.000000e+00> : vector<32xf32>
    %37 = vector.multi_reduction <add>, %36, %cst_26 [1] : vector<32x32xf32> to vector<32xf32>
    %38 = vector.shape_cast %37 : vector<32xf32> to vector<32x1xf32>
    %39 = tpu.concatenate %33, %38 in 1 : vector<32x1xf32>, vector<32x1xf32> -> vector<32x2xf32>
    %c0_27 = arith.constant 0 : index
    %c0_28 = arith.constant 0 : index
    %40 = vector.load %arg11[%c0_27, %c0_28] : memref<1x2xf32, #tpu.memory_space<vmem>>, vector<1x2xf32>
    %41 = vector.broadcast %40 : vector<1x2xf32> to vector<32x2xf32>
    %42 = arith.addf %39, %41 : vector<32x2xf32>
    %c0_29 = arith.constant 0 : index
    %c0_30 = arith.constant 0 : index
    %43 = vector.load %arg12[%c0_29, %c0_30] : memref<32x2xf32, #tpu.memory_space<vmem>>, vector<32x2xf32>
    tpu.vector_store %arg12[%c0_29, %c0_30], %42 {strides = array<i32>} : memref<32x2xf32, #tpu.memory_space<vmem>>, vector<32x2xf32>,
    return
  }
  func.func @transform_0(%arg0: i32) -> (i32, i32) {
    %c0_i32 = arith.constant 0 : i32
    %c0_i32_0 = arith.constant 0 : i32
    return %arg0, %c0_i32 : i32, i32
  }
  func.func @transform_1(%arg0: i32) -> (i32, i32) {
    %c0_i32 = arith.constant 0 : i32
    %c0_i32_0 = arith.constant 0 : i32
    return %arg0, %c0_i32 : i32, i32
  }
  func.func @transform_2(%arg0: i32) -> (i32, i32) {
    %c0_i32 = arith.constant 0 : i32
    %c0_i32_0 = arith.constant 0 : i32
    %c0_i32_1 = arith.constant 0 : i32
    return %c0_i32, %c0_i32_0 : i32, i32
  }
  func.func @transform_3(%arg0: i32) -> (i32, i32) {
    %c0_i32 = arith.constant 0 : i32
    %c0_i32_0 = arith.constant 0 : i32
    %c0_i32_1 = arith.constant 0 : i32
    return %c0_i32, %c0_i32_0 : i32, i32
  }
  func.func @transform_4(%arg0: i32) -> (i32, i32) {
    %c0_i32 = arith.constant 0 : i32
    %c0_i32_0 = arith.constant 0 : i32
    %c0_i32_1 = arith.constant 0 : i32
    return %c0_i32, %c0_i32_0 : i32, i32
  }
  func.func @transform_5(%arg0: i32) -> (i32, i32) {
    %c0_i32 = arith.constant 0 : i32
    %c0_i32_0 = arith.constant 0 : i32
    %c0_i32_1 = arith.constant 0 : i32
    return %c0_i32, %c0_i32_0 : i32, i32
  }
  func.func @transform_6(%arg0: i32) -> (i32, i32) {
    %c0_i32 = arith.constant 0 : i32
    %c0_i32_0 = arith.constant 0 : i32
    %c0_i32_1 = arith.constant 0 : i32
    return %c0_i32, %c0_i32_0 : i32, i32
  }
  func.func @transform_7(%arg0: i32) -> (i32, i32) {
    %c0_i32 = arith.constant 0 : i32
    %c0_i32_0 = arith.constant 0 : i32
    %c0_i32_1 = arith.constant 0 : i32
    return %c0_i32, %c0_i32_0 : i32, i32
  }
  func.func @transform_8(%arg0: i32) -> (i32, i32) {
    %c0_i32 = arith.constant 0 : i32
    %c0_i32_0 = arith.constant 0 : i32
    %c0_i32_1 = arith.constant 0 : i32
    return %c0_i32, %c0_i32_0 : i32, i32
  }
  func.func @transform_9(%arg0: i32) -> (i32, i32) {
    %c0_i32 = arith.constant 0 : i32
    %c0_i32_0 = arith.constant 0 : i32
    %c0_i32_1 = arith.constant 0 : i32
    return %c0_i32, %c0_i32_0 : i32, i32
  }
  func.func @transform_10(%arg0: i32) -> (i32, i32) {
    %c0_i32 = arith.constant 0 : i32
    %c0_i32_0 = arith.constant 0 : i32
    %c0_i32_1 = arith.constant 0 : i32
    return %c0_i32, %c0_i32_0 : i32, i32
  }
  func.func @transform_11(%arg0: i32) -> (i32, i32) {
    %c0_i32 = arith.constant 0 : i32
    %c0_i32_0 = arith.constant 0 : i32
    return %arg0, %c0_i32 : i32, i32
  }
}

</mosaic_0001>

<llo_original>
// kernel: tpu_custom_call.1
$region0: #{tpu_custom_call.1}
  #allocation0 [shape = 'u32[]', space=smem, size = 0x4, offset = 0x4, fixed_abs, tag = 'smem constant byte address 0x4 - core index']
  #allocation1 [shape = 'u32[144,128]{1,0:T(1,128)}', space=vmem, size = 0x12000, scoped, tag = 'internal scratch']
  %s0 = inlined_call_operand.vmem [shape: f32[32,12], index: 0, kind: input, shape index: {}]
  %s1 = inlined_call_operand.vmem [shape: f32[32,4], index: 1, kind: input, shape index: {}]
  %s2 = inlined_call_operand.vmem [shape: f32[12,256], index: 2, kind: input, shape index: {}]
  %s3 = inlined_call_operand.vmem [shape: f32[4,256], index: 3, kind: input, shape index: {}]
  %s4 = inlined_call_operand.vmem [shape: f32[1,256], index: 4, kind: input, shape index: {}]
  %s5 = inlined_call_operand.vmem [shape: f32[128,32], index: 5, kind: input, shape index: {}]
  %s6 = inlined_call_operand.vmem [shape: f32[1,32], index: 6, kind: input, shape index: {}]
  %s7 = inlined_call_operand.vmem [shape: f32[128,32], index: 7, kind: input, shape index: {}]
  %s8 = inlined_call_operand.vmem [shape: f32[1,32], index: 8, kind: input, shape index: {}]
  %s9 = inlined_call_operand.vmem [shape: f32[2,32], index: 9, kind: input, shape index: {}]
  %s10 = inlined_call_operand.vmem [shape: f32[1,2], index: 10, kind: input, shape index: {}]
  %s11 = inlined_call_operand.vmem [shape: f32[32,2], index: 11, kind: output, shape index: {}]
  %s12 = sld [smem:[#allocation0]]
  $region54: #{tpu_custom_call.1} parent=0
    _
  %s14 = ssub.s32 1, %s12
  %s15 = scalar_select 0, %s14, %s12
  // Predicated region
  $region2: #{tpu_custom_call.1} parent=0 // pred_check
    _
  $region3: #{tpu_custom_call.1} parent=0 // pred_check_branch
    %17 = sbr.rel (0) target = $region5
  $region4: #{tpu_custom_call.1} parent=0 // pred_region
    _
  $region5: #{tpu_custom_call.1} parent=0 // pred_fallthru
    _
  // Predicated region
  $region6: #{tpu_custom_call.1} parent=0 // pred_check
    _
  $region7: #{tpu_custom_call.1} parent=0 // pred_check_branch
    %19 = sbr.rel (0) target = $region9
  $region8: #{tpu_custom_call.1} parent=0 // pred_region
    _
  $region9: #{tpu_custom_call.1} parent=0 // pred_fallthru
    _
  // Predicated region
  $region10: #{tpu_custom_call.1} parent=0 // pred_check
    _
  $region11: #{tpu_custom_call.1} parent=0 // pred_check_branch
    %21 = sbr.rel (0) target = $region13
  $region12: #{tpu_custom_call.1} parent=0 // pred_region
    _
  $region13: #{tpu_custom_call.1} parent=0 // pred_fallthru
    _
  // Predicated region
  $region14: #{tpu_custom_call.1} parent=0 // pred_check
    _
  $region15: #{tpu_custom_call.1} parent=0 // pred_check_branch
    %23 = sbr.rel (0) target = $region17
  $region16: #{tpu_custom_call.1} parent=0 // pred_region
    _
  $region17: #{tpu_custom_call.1} parent=0 // pred_fallthru
    _
  // Predicated region
  $region18: #{tpu_custom_call.1} parent=0 // pred_check
    _
  $region19: #{tpu_custom_call.1} parent=0 // pred_check_branch
    %25 = sbr.rel (0) target = $region21
  $region20: #{tpu_custom_call.1} parent=0 // pred_region
    _
  $region21: #{tpu_custom_call.1} parent=0 // pred_fallthru
    _
  // Predicated region
  $region22: #{tpu_custom_call.1} parent=0 // pred_check
    _
  $region23: #{tpu_custom_call.1} parent=0 // pred_check_branch
    %27 = sbr.rel (0) target = $region25
  $region24: #{tpu_custom_call.1} parent=0 // pred_region
    _
  $region25: #{tpu_custom_call.1} parent=0 // pred_fallthru
    _
  // Predicated region
  $region26: #{tpu_custom_call.1} parent=0 // pred_check
    _
  $region27: #{tpu_custom_call.1} parent=0 // pred_check_branch
    %29 = sbr.rel (0) target = $region29
  $region28: #{tpu_custom_call.1} parent=0 // pred_region
    _
  $region29: #{tpu_custom_call.1} parent=0 // pred_fallthru
    _
  // Predicated region
  $region30: #{tpu_custom_call.1} parent=0 // pred_check
    _
  $region31: #{tpu_custom_call.1} parent=0 // pred_check_branch
    %31 = sbr.rel (0) target = $region33
  $region32: #{tpu_custom_call.1} parent=0 // pred_region
    _
  $region33: #{tpu_custom_call.1} parent=0 // pred_fallthru
    _
  // Predicated region
  $region34: #{tpu_custom_call.1} parent=0 // pred_check
    _
  $region35: #{tpu_custom_call.1} parent=0 // pred_check_branch
    %33 = sbr.rel (0) target = $region37
  $region36: #{tpu_custom_call.1} parent=0 // pred_region
    _
  $region37: #{tpu_custom_call.1} parent=0 // pred_fallthru
    _
  // Predicated region
  $region38: #{tpu_custom_call.1} parent=0 // pred_check
    _
  $region39: #{tpu_custom_call.1} parent=0 // pred_check_branch
    %35 = sbr.rel (0) target = $region41
  $region40: #{tpu_custom_call.1} parent=0 // pred_region
    _
  $region41: #{tpu_custom_call.1} parent=0 // pred_fallthru
    _
  // Predicated region
  $region42: #{tpu_custom_call.1} parent=0 // pred_check
    _
  $region43: #{tpu_custom_call.1} parent=0 // pred_check_branch
    %37 = sbr.rel (0) target = $region45
  $region44: #{tpu_custom_call.1} parent=0 // pred_region
    _
  $region45: #{tpu_custom_call.1} parent=0 // pred_fallthru
    _
  %v38 = vld [vmem:[%s0] sm:$0xff]
  %v39 = vld [vmem:[%s0 + $0x8] sm:$0xff]
  %v40 = vld [vmem:[%s0 + $0x10] sm:$0xff]
  %v41 = vld [vmem:[%s0 + $0x18] sm:$0xff]
  %v42 = vld [vmem:[%s2] sm:$0xff]
  %v43 = vld [vmem:[%s2 + $0x8] sm:$0xff]
  %v44 = vld [vmem:[%s2 + $0x10] sm:$0xf]
  %v45 = vld [vmem:[%s2 + $0x18] sm:$0xf]
  %v46 = vld [vmem:[%s1] sm:$0xff]
  %v47 = vld [vmem:[%s1 + $0x8] sm:$0xff]
  %v48 = vld [vmem:[%s1 + $0x10] sm:$0xff]
  %v49 = vld [vmem:[%s1 + $0x18] sm:$0xff]
  %v50 = vld [vmem:[%s3] sm:$0xff]
  %v52 = vcombine.high %v50, %v50
  %vm53 = vcmask 31744
  %v55 = vsel %vm53, %v46, 0
  %v58 = vsel %vm53, %v47, 0
  %v61 = vsel %vm53, %v48, 0
  %v64 = vsel %vm53, %v49, 0
  %vm66 = vcmask 1043456
  %v67 = vsel %vm66, %v50, 0
  %v69 = vsel %vm66, %v52, 0
  %71 = vmatprep.subr.mxu0 %v69
  %72 = vmatpush1.msra.mxu0 %v67
  %73 = vmatprep.subr.mxu0 0.0
  %74 = vmatpush1.msra.mxu0 0.0
  %75 = vmatprep.subr.mxu0 0.0
  %76 = vmatpush1.msra.mxu0 0.0
  %77 = vmatprep.subr.mxu0 0.0
  %78 = vmatpush1.msra.mxu0 0.0
  %79 = vmatprep.subr.mxu0 0.0
  %80 = vmatpush1.msra.mxu0 0.0
  %81 = vmatprep.subr.mxu0 0.0
  %82 = vmatpush1.msra.mxu0 0.0
  %83 = vmatprep.subr.mxu0 0.0
  %84 = vmatpush1.msra.mxu0 0.0
  %85 = vmatprep.subr.mxu0 0.0
  %86 = vmatpush1.msra.mxu0 0.0
  %87 = vmatprep.subr.mxu0 0.0
  %88 = vmatpush1.msra.mxu0 0.0
  %89 = vmatprep.subr.mxu0 0.0
  %90 = vmatpush1.msra.mxu0 0.0
  %91 = vmatprep.subr.mxu0 0.0
  %92 = vmatpush1.msra.mxu0 0.0
  %93 = vmatprep.subr.mxu0 0.0
  %94 = vmatpush1.msra.mxu0 0.0
  %95 = vmatprep.subr.mxu0 0.0
  %96 = vmatpush1.msra.mxu0 0.0
  %97 = vmatprep.subr.mxu0 0.0
  %98 = vmatpush1.msra.mxu0 0.0
  %99 = vmatprep.subr.mxu0 0.0
  %100 = vmatpush1.msra.mxu0 0.0
  %101 = vmatprep.subr.mxu0 0.0
  %102 = vmatpush1.msra.mxu0 0.0
  %103 = vmatprep.subr.mxu0 0.0
  %104 = vmatpush1.msra.mxu0 0.0
  %105 = vmatprep.subr.mxu0 0.0
  %106 = vmatpush1.msra.mxu0 0.0
  %107 = vmatprep.subr.mxu0 0.0
  %108 = vmatpush1.msra.mxu0 0.0
  %109 = vmatprep.subr.mxu0 0.0
  %110 = vmatpush1.msra.mxu0 0.0
  %111 = vmatprep.subr.mxu0 0.0
  %112 = vmatpush1.msra.mxu0 0.0
  %113 = vmatprep.subr.mxu0 0.0
  %114 = vmatpush1.msra.mxu0 0.0
  %115 = vmatprep.subr.mxu0 0.0
  %116 = vmatpush1.msra.mxu0 0.0
  %117 = vmatprep.subr.mxu0 0.0
  %118 = vmatpush1.msra.mxu0 0.0
  %119 = vmatprep.subr.mxu0 0.0
  %120 = vmatpush1.msra.mxu0 0.0
  %121 = vmatprep.subr.mxu0 0.0
  %122 = vmatpush1.msra.mxu0 0.0
  %123 = vmatprep.subr.mxu0 0.0
  %124 = vmatpush1.msra.mxu0 0.0
  %125 = vmatprep.subr.mxu0 0.0
  %126 = vmatpush1.msra.mxu0 0.0
  %127 = vmatprep.subr.mxu0 0.0
  %128 = vmatpush1.msra.mxu0 0.0
  %129 = vmatprep.subr.mxu0 0.0
  %130 = vmatpush1.msra.mxu0 0.0
  %131 = vmatprep.subr.mxu0 0.0
  %132 = vmatpush1.msra.mxu0 0.0
  %133 = vmatprep.subr.mxu0 0.0
  %134 = vmatpush1.msra.mxu0 0.0
  %135 = vmatprep.mubr.f32.mxu0 0.0
  %136 = vmatmul.mubr.f32.gmra.mrb[0].mxu0 %v55
  %v137 = vpop.f32.mrb[0].mxu0
  %v138 = vadd.f32 0.0, %v137
  %v139 = vpop.f32.mrb[0].mxu0
  %v140 = vadd.f32 0.0, %v139
  %141 = vmatprep.mubr.f32.mxu0 0.0
  %142 = vmatmul.mubr.f32.gmra.mrb[0].mxu0 %v58
  %v143 = vpop.f32.mrb[0].mxu0
  %v144 = vadd.f32 0.0, %v143
  %v145 = vpop.f32.mrb[0].mxu0
  %v146 = vadd.f32 0.0, %v145
  %147 = vmatprep.mubr.f32.mxu0 0.0
  %148 = vmatmul.mubr.f32.gmra.mrb[0].mxu0 %v61
  %v149 = vpop.f32.mrb[0].mxu0
  %v150 = vadd.f32 0.0, %v149
  %v151 = vpop.f32.mrb[0].mxu0
  %v152 = vadd.f32 0.0, %v151
  %153 = vmatprep.mubr.f32.mxu0 0.0
  %154 = vmatmul.mubr.f32.gmra.mrb[0].mxu0 %v64
  %v155 = vpop.f32.mrb[0].mxu0
  %v156 = vadd.f32 0.0, %v155
  %v157 = vpop.f32.mrb[0].mxu0
  %v158 = vadd.f32 0.0, %v157
  %159 = vdwg.mxu0
  %vm160 = vcmask 97280
  %v162 = vsel %vm160, %v38, 0
  %v165 = vsel %vm160, %v39, 0
  %v168 = vsel %vm160, %v40, 0
  %v171 = vsel %vm160, %v41, 0
  %v174 = vsel %vm66, %v44, 0
  %v177 = vsel %vm66, %v45, 0
  %179 = vmatprep.subr.mxu0 %v43
  %180 = vmatpush1.msra.mxu0 %v42
  %181 = vmatprep.subr.mxu0 %v177
  %182 = vmatpush1.msra.mxu0 %v174
  %183 = vmatprep.subr.mxu0 0.0
  %184 = vmatpush1.msra.mxu0 0.0
  %185 = vmatprep.subr.mxu0 0.0
  %186 = vmatpush1.msra.mxu0 0.0
  %187 = vmatprep.subr.mxu0 0.0
  %188 = vmatpush1.msra.mxu0 0.0
  %189 = vmatprep.subr.mxu0 0.0
  %190 = vmatpush1.msra.mxu0 0.0
  %191 = vmatprep.subr.mxu0 0.0
  %192 = vmatpush1.msra.mxu0 0.0
  %193 = vmatprep.subr.mxu0 0.0
  %194 = vmatpush1.msra.mxu0 0.0
  %195 = vmatprep.subr.mxu0 0.0
  %196 = vmatpush1.msra.mxu0 0.0
  %197 = vmatprep.subr.mxu0 0.0
  %198 = vmatpush1.msra.mxu0 0.0
  %199 = vmatprep.subr.mxu0 0.0
  %200 = vmatpush1.msra.mxu0 0.0
  %201 = vmatprep.subr.mxu0 0.0
  %202 = vmatpush1.msra.mxu0 0.0
  %203 = vmatprep.subr.mxu0 0.0
  %204 = vmatpush1.msra.mxu0 0.0
  %205 = vmatprep.subr.mxu0 0.0
  %206 = vmatpush1.msra.mxu0 0.0
  %207 = vmatprep.subr.mxu0 0.0
  %208 = vmatpush1.msra.mxu0 0.0
  %209 = vmatprep.subr.mxu0 0.0
  %210 = vmatpush1.msra.mxu0 0.0
  %211 = vmatprep.subr.mxu0 0.0
  %212 = vmatpush1.msra.mxu0 0.0
  %213 = vmatprep.subr.mxu0 0.0
  %214 = vmatpush1.msra.mxu0 0.0
  %215 = vmatprep.subr.mxu0 0.0
  %216 = vmatpush1.msra.mxu0 0.0
  %217 = vmatprep.subr.mxu0 0.0
  %218 = vmatpush1.msra.mxu0 0.0
  %219 = vmatprep.subr.mxu0 0.0
  %220 = vmatpush1.msra.mxu0 0.0
  %221 = vmatprep.subr.mxu0 0.0
  %222 = vmatpush1.msra.mxu0 0.0
  %223 = vmatprep.subr.mxu0 0.0
  %224 = vmatpush1.msra.mxu0 0.0
  %225 = vmatprep.subr.mxu0 0.0
  %226 = vmatpush1.msra.mxu0 0.0
  %227 = vmatprep.subr.mxu0 0.0
  %228 = vmatpush1.msra.mxu0 0.0
  %229 = vmatprep.subr.mxu0 0.0
  %230 = vmatpush1.msra.mxu0 0.0
  %231 = vmatprep.subr.mxu0 0.0
  %232 = vmatpush1.msra.mxu0 0.0
  %233 = vmatprep.subr.mxu0 0.0
  %234 = vmatpush1.msra.mxu0 0.0
  %235 = vmatprep.subr.mxu0 0.0
  %236 = vmatpush1.msra.mxu0 0.0
  %237 = vmatprep.subr.mxu0 0.0
  %238 = vmatpush1.msra.mxu0 0.0
  %239 = vmatprep.subr.mxu0 0.0
  %240 = vmatpush1.msra.mxu0 0.0
  %241 = vmatprep.subr.mxu0 0.0
  %242 = vmatpush1.msra.mxu0 0.0
  %243 = vmatprep.mubr.f32.mxu0 0.0
  %244 = vmatmul.mubr.f32.gmra.mrb[0].mxu0 %v162
  %v245 = vpop.f32.mrb[0].mxu0
  %v246 = vadd.f32 %v138, %v245
  %v247 = vpop.f32.mrb[0].mxu0
  %v248 = vadd.f32 %v140, %v247
  %249 = vmatprep.mubr.f32.mxu0 0.0
  %250 = vmatmul.mubr.f32.gmra.mrb[0].mxu0 %v165
  %v251 = vpop.f32.mrb[0].mxu0
  %v252 = vadd.f32 %v144, %v251
  %v253 = vpop.f32.mrb[0].mxu0
  %v254 = vadd.f32 %v146, %v253
  %255 = vmatprep.mubr.f32.mxu0 0.0
  %256 = vmatmul.mubr.f32.gmra.mrb[0].mxu0 %v168
  %v257 = vpop.f32.mrb[0].mxu0
  %v258 = vadd.f32 %v150, %v257
  %v259 = vpop.f32.mrb[0].mxu0
  %v260 = vadd.f32 %v152, %v259
  %261 = vmatprep.mubr.f32.mxu0 0.0
  %262 = vmatmul.mubr.f32.gmra.mrb[0].mxu0 %v171
  %v263 = vpop.f32.mrb[0].mxu0
  %v264 = vadd.f32 %v156, %v263
  %v265 = vpop.f32.mrb[0].mxu0
  %v266 = vadd.f32 %v158, %v265
  %267 = vdwg.mxu0
  %v268 = vld [vmem:[%s4] sm:$0x3]
  %v270 = vlaneseq
  %v271 = vshrl.u32 %v270, 7
  %v272 = vsub.s32 0, %v271
  %v273 = vrot.slane %v268, %v272
  %v274 = vlaneseq
  %v275 = vshrl.u32 %v274, 7
  %v276 = vsub.s32 1, %v275
  %v277 = vrot.slane %v268, %v276
  %v280 = vadd.f32 %v246, %v273
  %v281 = vadd.f32 %v248, %v277
  %v282 = vadd.f32 %v252, %v273
  %v283 = vadd.f32 %v254, %v277
  %v284 = vadd.f32 %v258, %v273
  %v285 = vadd.f32 %v260, %v277
  %v286 = vadd.f32 %v264, %v273
  %v287 = vadd.f32 %v266, %v277
  %v288 = vmax.f32 %v280, 0.0
  %v289 = vmax.f32 %v281, 0.0
  %v290 = vmax.f32 %v282, 0.0
  %v291 = vmax.f32 %v283, 0.0
  %v292 = vmax.f32 %v284, 0.0
  %v293 = vmax.f32 %v285, 0.0
  %v294 = vmax.f32 %v286, 0.0
  %v295 = vmax.f32 %v287, 0.0
  %v296 = vld [vmem:[%s5] sm:$0xff]
  %v297 = vld [vmem:[%s5 + $0x8] sm:$0xff]
  %v298 = vld [vmem:[%s5 + $0x10] sm:$0xff]
  %v299 = vld [vmem:[%s5 + $0x18] sm:$0xff]
  %v300 = vld [vmem:[%s5 + $0x20] sm:$0xff]
  %v301 = vld [vmem:[%s5 + $0x28] sm:$0xff]
  %v302 = vld [vmem:[%s5 + $0x30] sm:$0xff]
  %v303 = vld [vmem:[%s5 + $0x38] sm:$0xff]
  %v304 = vld [vmem:[%s5 + $0x40] sm:$0xff]
  %v305 = vld [vmem:[%s5 + $0x48] sm:$0xff]
  %v306 = vld [vmem:[%s5 + $0x50] sm:$0xff]
  %v307 = vld [vmem:[%s5 + $0x58] sm:$0xff]
  %v308 = vld [vmem:[%s5 + $0x60] sm:$0xff]
  %v309 = vld [vmem:[%s5 + $0x68] sm:$0xff]
  %v310 = vld [vmem:[%s5 + $0x70] sm:$0xff]
  %v311 = vld [vmem:[%s5 + $0x78] sm:$0xff]
  %v312 = vld [vmem:[%s6] sm:$0x1]
  %v314 = vlaneseq
  %v315 = vshrl.u32 %v314, 7
  %v316 = vsub.s32 0, %v315
  %v317 = vrot.slane %v312, %v316
  %319 = vmatprep.subr.mxu0 0.0
  %320 = vmatpush1.msra.mxu0 %v296
  %321 = vmatprep.subr.mxu0 0.0
  %322 = vmatpush1.msra.mxu0 %v297
  %323 = vmatprep.subr.mxu0 0.0
  %324 = vmatpush1.msra.mxu0 %v298
  %325 = vmatprep.subr.mxu0 0.0
  %326 = vmatpush1.msra.mxu0 %v299
  %327 = vmatprep.subr.mxu0 0.0
  %328 = vmatpush1.msra.mxu0 %v300
  %329 = vmatprep.subr.mxu0 0.0
  %330 = vmatpush1.msra.mxu0 %v301
  %331 = vmatprep.subr.mxu0 0.0
  %332 = vmatpush1.msra.mxu0 %v302
  %333 = vmatprep.subr.mxu0 0.0
  %334 = vmatpush1.msra.mxu0 %v303
  %335 = vmatprep.subr.mxu0 0.0
  %336 = vmatpush1.msra.mxu0 %v304
  %337 = vmatprep.subr.mxu0 0.0
  %338 = vmatpush1.msra.mxu0 %v305
  %339 = vmatprep.subr.mxu0 0.0
  %340 = vmatpush1.msra.mxu0 %v306
  %341 = vmatprep.subr.mxu0 0.0
  %342 = vmatpush1.msra.mxu0 %v307
  %343 = vmatprep.subr.mxu0 0.0
  %344 = vmatpush1.msra.mxu0 %v308
  %345 = vmatprep.subr.mxu0 0.0
  %346 = vmatpush1.msra.mxu0 %v309
  %347 = vmatprep.subr.mxu0 0.0
  %348 = vmatpush1.msra.mxu0 %v310
  %349 = vmatprep.subr.mxu0 0.0
  %350 = vmatpush1.msra.mxu0 %v311
  %351 = vmatprep.subr.mxu0 0.0
  %352 = vmatpush1.msra.mxu0 0.0
  %353 = vmatprep.subr.mxu0 0.0
  %354 = vmatpush1.msra.mxu0 0.0
  %355 = vmatprep.subr.mxu0 0.0
  %356 = vmatpush1.msra.mxu0 0.0
  %357 = vmatprep.subr.mxu0 0.0
  %358 = vmatpush1.msra.mxu0 0.0
  %359 = vmatprep.subr.mxu0 0.0
  %360 = vmatpush1.msra.mxu0 0.0
  %361 = vmatprep.subr.mxu0 0.0
  %362 = vmatpush1.msra.mxu0 0.0
  %363 = vmatprep.subr.mxu0 0.0
  %364 = vmatpush1.msra.mxu0 0.0
  %365 = vmatprep.subr.mxu0 0.0
  %366 = vmatpush1.msra.mxu0 0.0
  %367 = vmatprep.subr.mxu0 0.0
  %368 = vmatpush1.msra.mxu0 0.0
  %369 = vmatprep.subr.mxu0 0.0
  %370 = vmatpush1.msra.mxu0 0.0
  %371 = vmatprep.subr.mxu0 0.0
  %372 = vmatpush1.msra.mxu0 0.0
  %373 = vmatprep.subr.mxu0 0.0
  %374 = vmatpush1.msra.mxu0 0.0
  %375 = vmatprep.subr.mxu0 0.0
  %376 = vmatpush1.msra.mxu0 0.0
  %377 = vmatprep.subr.mxu0 0.0
  %378 = vmatpush1.msra.mxu0 0.0
  %379 = vmatprep.subr.mxu0 0.0
  %380 = vmatpush1.msra.mxu0 0.0
  %381 = vmatprep.subr.mxu0 0.0
  %382 = vmatpush1.msra.mxu0 0.0
  %383 = vmatprep.mubr.f32.mxu0 0.0
  %384 = vmatmul.mubr.f32.gmra.mrb[0].mxu0 %v288
  %v385 = vpop.f32.mrb[0].mxu0
  %v386 = vadd.f32 %v317, %v385
  %v387 = vpop.f32.mrb[0].mxu0
  %388 = vmatprep.mubr.f32.mxu0 0.0
  %389 = vmatmul.mubr.f32.gmra.mrb[0].mxu0 %v290
  %v390 = vpop.f32.mrb[0].mxu0
  %v391 = vadd.f32 %v317, %v390
  %v392 = vpop.f32.mrb[0].mxu0
  %393 = vmatprep.mubr.f32.mxu0 0.0
  %394 = vmatmul.mubr.f32.gmra.mrb[0].mxu0 %v292
  %v395 = vpop.f32.mrb[0].mxu0
  %v396 = vadd.f32 %v317, %v395
  %v397 = vpop.f32.mrb[0].mxu0
  %398 = vmatprep.mubr.f32.mxu0 0.0
  %399 = vmatmul.mubr.f32.gmra.mrb[0].mxu0 %v294
  %v400 = vpop.f32.mrb[0].mxu0
  %v401 = vadd.f32 %v317, %v400
  %v402 = vpop.f32.mrb[0].mxu0
  %403 = vdwg.mxu0
  %v404 = vmax.f32 %v386, 0.0
  %v405 = vmax.f32 %v391, 0.0
  %v406 = vmax.f32 %v396, 0.0
  %v407 = vmax.f32 %v401, 0.0
  %v408 = vld [vmem:[%s7] sm:$0xff]
  %v409 = vld [vmem:[%s7 + $0x8] sm:$0xff]
  %v410 = vld [vmem:[%s7 + $0x10] sm:$0xff]
  %v411 = vld [vmem:[%s7 + $0x18] sm:$0xff]
  %v412 = vld [vmem:[%s7 + $0x20] sm:$0xff]
  %v413 = vld [vmem:[%s7 + $0x28] sm:$0xff]
  %v414 = vld [vmem:[%s7 + $0x30] sm:$0xff]
  %v415 = vld [vmem:[%s7 + $0x38] sm:$0xff]
  %v416 = vld [vmem:[%s7 + $0x40] sm:$0xff]
  %v417 = vld [vmem:[%s7 + $0x48] sm:$0xff]
  %v418 = vld [vmem:[%s7 + $0x50] sm:$0xff]
  %v419 = vld [vmem:[%s7 + $0x58] sm:$0xff]
  %v420 = vld [vmem:[%s7 + $0x60] sm:$0xff]
  %v421 = vld [vmem:[%s7 + $0x68] sm:$0xff]
  %v422 = vld [vmem:[%s7 + $0x70] sm:$0xff]
  %v423 = vld [vmem:[%s7 + $0x78] sm:$0xff]
  %v424 = vld [vmem:[%s8] sm:$0x1]
  %v426 = vlaneseq
  %v427 = vshrl.u32 %v426, 7
  %v428 = vsub.s32 0, %v427
  %v429 = vrot.slane %v424, %v428
  %431 = vmatprep.subr.mxu0 0.0
  %432 = vmatpush1.msra.mxu0 %v408
  %433 = vmatprep.subr.mxu0 0.0
  %434 = vmatpush1.msra.mxu0 %v409
  %435 = vmatprep.subr.mxu0 0.0
  %436 = vmatpush1.msra.mxu0 %v410
  %437 = vmatprep.subr.mxu0 0.0
  %438 = vmatpush1.msra.mxu0 %v411
  %439 = vmatprep.subr.mxu0 0.0
  %440 = vmatpush1.msra.mxu0 %v412
  %441 = vmatprep.subr.mxu0 0.0
  %442 = vmatpush1.msra.mxu0 %v413
  %443 = vmatprep.subr.mxu0 0.0
  %444 = vmatpush1.msra.mxu0 %v414
  %445 = vmatprep.subr.mxu0 0.0
  %446 = vmatpush1.msra.mxu0 %v415
  %447 = vmatprep.subr.mxu0 0.0
  %448 = vmatpush1.msra.mxu0 %v416
  %449 = vmatprep.subr.mxu0 0.0
  %450 = vmatpush1.msra.mxu0 %v417
  %451 = vmatprep.subr.mxu0 0.0
  %452 = vmatpush1.msra.mxu0 %v418
  %453 = vmatprep.subr.mxu0 0.0
  %454 = vmatpush1.msra.mxu0 %v419
  %455 = vmatprep.subr.mxu0 0.0
  %456 = vmatpush1.msra.mxu0 %v420
  %457 = vmatprep.subr.mxu0 0.0
  %458 = vmatpush1.msra.mxu0 %v421
  %459 = vmatprep.subr.mxu0 0.0
  %460 = vmatpush1.msra.mxu0 %v422
  %461 = vmatprep.subr.mxu0 0.0
  %462 = vmatpush1.msra.mxu0 %v423
  %463 = vmatprep.subr.mxu0 0.0
  %464 = vmatpush1.msra.mxu0 0.0
  %465 = vmatprep.subr.mxu0 0.0
  %466 = vmatpush1.msra.mxu0 0.0
  %467 = vmatprep.subr.mxu0 0.0
  %468 = vmatpush1.msra.mxu0 0.0
  %469 = vmatprep.subr.mxu0 0.0
  %470 = vmatpush1.msra.mxu0 0.0
  %471 = vmatprep.subr.mxu0 0.0
  %472 = vmatpush1.msra.mxu0 0.0
  %473 = vmatprep.subr.mxu0 0.0
  %474 = vmatpush1.msra.mxu0 0.0
  %475 = vmatprep.subr.mxu0 0.0
  %476 = vmatpush1.msra.mxu0 0.0
  %477 = vmatprep.subr.mxu0 0.0
  %478 = vmatpush1.msra.mxu0 0.0
  %479 = vmatprep.subr.mxu0 0.0
  %480 = vmatpush1.msra.mxu0 0.0
  %481 = vmatprep.subr.mxu0 0.0
  %482 = vmatpush1.msra.mxu0 0.0
  %483 = vmatprep.subr.mxu0 0.0
  %484 = vmatpush1.msra.mxu0 0.0
  %485 = vmatprep.subr.mxu0 0.0
  %486 = vmatpush1.msra.mxu0 0.0
  %487 = vmatprep.subr.mxu0 0.0
  %488 = vmatpush1.msra.mxu0 0.0
  %489 = vmatprep.subr.mxu0 0.0
  %490 = vmatpush1.msra.mxu0 0.0
  %491 = vmatprep.subr.mxu0 0.0
  %492 = vmatpush1.msra.mxu0 0.0
  %493 = vmatprep.subr.mxu0 0.0
  %494 = vmatpush1.msra.mxu0 0.0
  %495 = vmatprep.mubr.f32.mxu0 0.0
  %496 = vmatmul.mubr.f32.gmra.mrb[0].mxu0 %v289
  %v497 = vpop.f32.mrb[0].mxu0
  %v498 = vadd.f32 %v429, %v497
  %v499 = vpop.f32.mrb[0].mxu0
  %500 = vmatprep.mubr.f32.mxu0 0.0
  %501 = vmatmul.mubr.f32.gmra.mrb[0].mxu0 %v291
  %v502 = vpop.f32.mrb[0].mxu0
  %v503 = vadd.f32 %v429, %v502
  %v504 = vpop.f32.mrb[0].mxu0
  %505 = vmatprep.mubr.f32.mxu0 0.0
  %506 = vmatmul.mubr.f32.gmra.mrb[0].mxu0 %v293
  %v507 = vpop.f32.mrb[0].mxu0
  %v508 = vadd.f32 %v429, %v507
  %v509 = vpop.f32.mrb[0].mxu0
  %510 = vmatprep.mubr.f32.mxu0 0.0
  %511 = vmatmul.mubr.f32.gmra.mrb[0].mxu0 %v295
  %v512 = vpop.f32.mrb[0].mxu0
  %v513 = vadd.f32 %v429, %v512
  %v514 = vpop.f32.mrb[0].mxu0
  %515 = vdwg.mxu0
  %v516 = vmax.f32 %v498, 0.0
  %v517 = vmax.f32 %v503, 0.0
  %v518 = vmax.f32 %v508, 0.0
  %v519 = vmax.f32 %v513, 0.0
  %v520 = vld [vmem:[%s9] sm:$0x3]
  %v521 = vlaneseq
  %v522 = vshrl.u32 %v521, 7
  %v523 = vsub.s32 0, %v522
  %v524 = vrot.slane %v520, %v523
  %v525 = vmul.f32 %v404, %v524
  %v526 = vmul.f32 %v405, %v524
  %v527 = vmul.f32 %v406, %v524
  %v528 = vmul.f32 %v407, %v524
  %vm529 = vcmask 261120
  %v530 = vsel %vm529, %v525, 0.0
  %531 = vadd.xlane.f32.xlu0 %v530
  %v532 = vpop.xlane.xlu0 %531
  %v533 = vsel %vm529, %v526, 0.0
  %534 = vadd.xlane.f32.xlu0 %v533
  %v535 = vpop.xlane.xlu0 %534
  %v536 = vsel %vm529, %v527, 0.0
  %537 = vadd.xlane.f32.xlu0 %v536
  %v538 = vpop.xlane.xlu0 %537
  %v539 = vsel %vm529, %v528, 0.0
  %540 = vadd.xlane.f32.xlu0 %v539
  %v541 = vpop.xlane.xlu0 %540
  %v542 = vlaneseq
  %v543 = vshrl.u32 %v542, 7
  %v544 = vsub.s32 1, %v543
  %v545 = vrot.slane %v520, %v544
  %v546 = vmul.f32 %v516, %v545
  %v547 = vmul.f32 %v517, %v545
  %v548 = vmul.f32 %v518, %v545
  %v549 = vmul.f32 %v519, %v545
  %v550 = vsel %vm529, %v546, 0.0
  %551 = vadd.xlane.f32.xlu0 %v550
  %v552 = vpop.xlane.xlu0 %551
  %v553 = vsel %vm529, %v547, 0.0
  %554 = vadd.xlane.f32.xlu0 %v553
  %v555 = vpop.xlane.xlu0 %554
  %v556 = vsel %vm529, %v548, 0.0
  %557 = vadd.xlane.f32.xlu0 %v556
  %v558 = vpop.xlane.xlu0 %557
  %v559 = vsel %vm529, %v549, 0.0
  %560 = vadd.xlane.f32.xlu0 %v559
  %v561 = vpop.xlane.xlu0 %560
  %vm562 = vcmask 7168
  %v563 = vsel %vm562, %v532, %v552
  %v564 = vsel %vm562, %v535, %v555
  %v565 = vsel %vm562, %v538, %v558
  %v566 = vsel %vm562, %v541, %v561
  %v567 = vld [vmem:[%s10] sm:$0x1]
  %v569 = vlaneseq
  %v570 = vshrl.u32 %v569, 7
  %v571 = vsub.s32 0, %v570
  %v572 = vrot.slane %v567, %v571
  %v574 = vadd.f32 %v563, %v572
  %v575 = vadd.f32 %v564, %v572
  %v576 = vadd.f32 %v565, %v572
  %v577 = vadd.f32 %v566, %v572
  %vm578 = vcmask 15360
  %579 = vst.msk [vmem:[%s11] sm:$0xff] %vm578, %v574
  %580 = vst.msk [vmem:[%s11 + $0x8] sm:$0xff] %vm578, %v575
  %581 = vst.msk [vmem:[%s11 + $0x10] sm:$0xff] %vm578, %v576
  %582 = vst.msk [vmem:[%s11 + $0x18] sm:$0xff] %vm578, %v577
  // Predicated region
  $region46: #{tpu_custom_call.1} parent=0 // pred_check
    _
  $region47: #{tpu_custom_call.1} parent=0 // pred_check_branch
    %584 = sbr.rel (0) target = $region49
  $region48: #{tpu_custom_call.1} parent=0 // pred_region
    _
  $region49: #{tpu_custom_call.1} parent=0 // pred_fallthru
    _
  // Predicated region
  $region50: #{tpu_custom_call.1} parent=0 // pred_check
    _
  $region51: #{tpu_custom_call.1} parent=0 // pred_check_branch
    %586 = sbr.rel (0) target = $region53
  $region52: #{tpu_custom_call.1} parent=0 // pred_region
    _
  $region53: #{tpu_custom_call.1} parent=0 // pred_fallthru
    _

</llo_original>
